<compile_context>
chip_gen: v6e
topology: v6e:2x2x1
jax: 0.10.0
libtpu: 0.0.40
codegen_flags: <defaults>
</compile_context>

<pallas_src>
import functools

import jax
import jax.numpy as jnp
from jax.experimental import pallas as pl
from jax.experimental.pallas import tpu as pltpu

LANE = 128  # class dim padded to a full lane width -> unmasked vst stores


# -------------------------- Pallas kernels --------------------------
def token_head_kernel(x_ref, w_ao_ref, b_ao_ref, ao_ref, mean_ref, *, inv_s):
    """Fused aspect||opinion projection + per-batch sequence-sum accumulation.

    Grid = (batch tiles, sequence tiles).  The mean output block is revisited
    across the sequence ("arbitrary") axis: init at k==0, accumulate the f32
    partial sums, scale by 1/S at the last k.
    """
    Bt, St, H = x_ref.shape
    k = pl.program_id(1)

    @pl.when(k == 0)
    def _init():
        mean_ref[...] = jnp.zeros_like(mean_ref)

    x = x_ref[...]                                          # (Bt, St, H)

    # Single fused matmul against the lane-padded wa||wo slab, N = 128.
    x2 = x.reshape(Bt * St, H)
    ao = (jnp.dot(x2, w_ao_ref[...],
                  preferred_element_type=jnp.float32)
          + b_ao_ref[...])                                  # (Bt*St, 128) f32
    ao_ref[...] = ao.reshape(Bt, St, LANE).astype(ao_ref.dtype)

    # f32 partial sequence sum, accumulated in the revisited output block.
    mean_ref[...] += jnp.sum(x.astype(jnp.float32), axis=1, keepdims=True)

    @pl.when(k == pl.num_programs(1) - 1)
    def _finalize():
        mean_ref[...] = mean_ref[...] * inv_s               # sum * (1/S)


def pooled_head_kernel(mean_ref, wp_ref, bp_ref, ws_ref, bs_ref, sent_ref,
                       acc_ref):
    """K-tiled pooler (B, H) @ (H, H) + tanh + lane-padded sentiment matmul.

    Grid = (K tiles,).  The (B, H) accumulator lives in f32 VMEM scratch; the
    tanh + sentiment projection run once, at the last K step.
    """
    k = pl.program_id(0)

    @pl.when(k == 0)
    def _init():
        acc_ref[...] = jnp.zeros_like(acc_ref)

    # NOTE: means are kept f32 at the interface and only cast to the compute
    # dtype (bf16 by default) for the MXU contraction; accumulation stays f32.
    m = mean_ref[...].astype(wp_ref.dtype)                  # (B, Kt)
    acc_ref[...] += jnp.dot(m, wp_ref[...],
                            preferred_element_type=jnp.float32)

    @pl.when(k == pl.num_programs(0) - 1)
    def _finalize():
        pooled = jnp.tanh(acc_ref[...] + bp_ref[...])       # (B, H) f32
        sent_ref[...] = (jnp.dot(pooled.astype(ws_ref.dtype), ws_ref[...],
                                 preferred_element_type=jnp.float32)
                         + bs_ref[...]).astype(sent_ref.dtype)   # (B, 128)


# -------------------------- tiling / VMEM helpers --------------------------
def _physical_vmem_bytes():
    try:
        return int(pltpu.get_tpu_info().vmem_capacity_bytes)
    except Exception:
        return 64 << 20   # conservative fallback: v7x per-TC physical VMEM


def _pick_token_tiles(B, S, H, in_dsz, out_dsz, budget):
    """Largest (Bt, St) whose blocks fit the VMEM budget.  Preference order:
    (1) B//Bt >= 2 so the 'parallel' batch axis can shard across the 2 v7x
    TensorCores, (2) biggest block (HBM-roofline amortization), (3) fewest
    grid steps."""
    st_cands = [s for s in range(1, S + 1)
                if S % s == 0 and (s % 8 == 0 or s == S)]
    bt_cands = [b for b in range(1, B + 1) if B % b == 0]

    def footprint(bt, st):
        return (2 * bt * st * H * in_dsz           # input block, double-buffered
                + 2 * bt * st * LANE * out_dsz     # ao output block
                + 2 * bt * H * 4                   # mean output block (f32)
                + H * LANE * in_dsz + LANE * 4)    # single-buffered weights

    best_key, best = None, None
    for bt in bt_cands:
        for st in st_cands:
            if footprint(bt, st) > budget:
                continue
            multicore = (B == 1) or (B // bt >= 2)
            key = (multicore, bt * st, -((B // bt) * (S // st)))
            if best_key is None or key > best_key:
                best_key, best = key, (bt, st)
    if best is None:                      # nothing fits: smallest legal tiles
        best = (1, min(st_cands))
    return best


def _pick_pooler_ktile(B, H, dsz, budget):
    """Largest K tile (multiple of 128, or the full H) whose streamed blocks
    plus the resident sentiment weights fit the VMEM budget."""
    cands = sorted({H} | {k for k in range(128, H + 1, 128) if H % k == 0},
                   reverse=True)
    for kt in cands:
        nbuf = 1 if kt == H else 2        # single grid step -> single buffer
        est = (nbuf * (B * kt * 4 + kt * H * dsz)
               + H * 4 + H * LANE * dsz + LANE * 4
               + B * LANE * 4 + B * H * 4)
        if est <= budget:
            return kt
    return cands[-1]


# -------------------------- wrapper --------------------------
def absa_head(hidden_states, params, *, compute_dtype=jnp.bfloat16):
    """hidden_states: (B, S, H) float32. Returns dict of float32 logits."""
    B, S, H = hidden_states.shape
    C = params["wa"].shape[1]            # 3
    in_dsz = jnp.dtype(compute_dtype).itemsize
    out_dsz = in_dsz

    phys_vmem = _physical_vmem_bytes()
    vmem_cap = phys_vmem - (4 << 20)     # never exceed physical VMEM
    budget = phys_vmem - (8 << 20)       # tile-selection budget (headroom)

    # ---- pack weights: fuse aspect/opinion, pad class dim to a full lane ----
    w_ao = jnp.zeros((H, LANE), compute_dtype)
    w_ao = w_ao.at[:, :C].set(params["wa"].astype(compute_dtype))
    w_ao = w_ao.at[:, C:2 * C].set(params["wo"].astype(compute_dtype))
    b_ao = jnp.zeros((1, LANE), jnp.float32)
    b_ao = b_ao.at[:, :C].set(params["ba"])
    b_ao = b_ao.at[:, C:2 * C].set(params["bo"])

    ws_p = jnp.zeros((H, LANE), compute_dtype).at[:, :C].set(
        params["ws"].astype(compute_dtype))
    bs_p = jnp.zeros((1, LANE), jnp.float32).at[:, :C].set(params["bs"])

    wp = params["wp"].astype(compute_dtype)
    bp = params["bp"].astype(jnp.float32)

    x = hidden_states.astype(compute_dtype)

    # ---- kernel 1: fused token logits + per-batch means ----
    Bt, St = _pick_token_tiles(B, S, H, in_dsz, out_dsz, budget)
    nb, nk = B // Bt, S // St

    est1 = (2 * Bt * St * H * in_dsz + 2 * Bt * St * LANE * out_dsz
            + 2 * Bt * H * 4 + H * LANE * in_dsz + LANE * 4)
    cp1 = dict(dimension_semantics=("parallel", "arbitrary"))
    if est1 > (16 << 20):                # only above the conservative default
        cp1["vmem_limit_bytes"] = min(int(est1 * 3 // 2), vmem_cap)

    cost1 = pl.CostEstimate(
        flops=2 * B * S * H * LANE + B * S * H,
        transcendentals=0,
        bytes_accessed=(B * S * H * in_dsz + H * LANE * in_dsz + LANE * 4
                        + B * S * LANE * out_dsz + B * H * 4))

    ao_pad, means3 = pl.pallas_call(
        functools.partial(token_head_kernel, inv_s=1.0 / S),
        grid_spec=pltpu.PrefetchScalarGridSpec(
            num_scalar_prefetch=0,
            grid=(nb, nk),
            in_specs=[
                pl.BlockSpec((Bt, St, H), lambda i, k: (i, k, 0)),
                pl.BlockSpec((H, LANE), lambda i, k: (0, 0),
                             pipeline_mode=pl.Buffered(1)),   # fused wa||wo
                pl.BlockSpec((1, LANE), lambda i, k: (0, 0),
                             pipeline_mode=pl.Buffered(1)),   # fused ba||bo
            ],
            out_specs=[
                pl.BlockSpec((Bt, St, LANE), lambda i, k: (i, k, 0)),
                pl.BlockSpec((Bt, 1, H), lambda i, k: (i, 0, 0)),  # means acc
            ],
        ),
        out_shape=(
            jax.ShapeDtypeStruct((B, S, LANE), compute_dtype),
            jax.ShapeDtypeStruct((B, 1, H), jnp.float32),
        ),
        compiler_params=pltpu.CompilerParams(**cp1),
        cost_estimate=cost1,
    )(x, w_ao, b_ao)

    means = means3[:, 0, :]              # (B, H) f32

    # ---- kernel 2: K-tiled pooler + tanh + sentiment (M = B) ----
    Kt = _pick_pooler_ktile(B, H, in_dsz, budget)
    nkp = H // Kt
    stream_buf = pl.Buffered(2) if nkp > 1 else pl.Buffered(1)

    est2 = ((2 if nkp > 1 else 1) * (B * Kt * 4 + Kt * H * in_dsz)
            + H * 4 + H * LANE * in_dsz + LANE * 4
            + B * LANE * 4 + B * H * 4)
    cp2 = dict(dimension_semantics=("arbitrary",))
    if est2 > (16 << 20):
        cp2["vmem_limit_bytes"] = min(int(est2 * 3 // 2), vmem_cap)

    cost2 = pl.CostEstimate(
        flops=2 * B * H * H + 2 * B * H * LANE,
        transcendentals=B * H,
        bytes_accessed=(B * H * 4 + H * H * in_dsz + H * 4
                        + H * LANE * in_dsz + LANE * 4 + B * LANE * 4))

    sent_pad = pl.pallas_call(
        pooled_head_kernel,
        grid_spec=pltpu.PrefetchScalarGridSpec(
            num_scalar_prefetch=0,
            grid=(nkp,),
            in_specs=[
                pl.BlockSpec((B, Kt), lambda k: (0, k),
                             pipeline_mode=stream_buf),       # means K-slice
                pl.BlockSpec((Kt, H), lambda k: (k, 0),
                             pipeline_mode=stream_buf),       # pooler K-slice
                pl.BlockSpec((1, H), lambda k: (0, 0),
                             pipeline_mode=pl.Buffered(1)),   # pooler bias
                pl.BlockSpec((H, LANE), lambda k: (0, 0),
                             pipeline_mode=pl.Buffered(1)),   # sentiment w
                pl.BlockSpec((1, LANE), lambda k: (0, 0),
                             pipeline_mode=pl.Buffered(1)),   # sentiment b
            ],
            out_specs=[pl.BlockSpec((B, LANE), lambda k: (0, 0))],
            scratch_shapes=[pltpu.VMEM((B, H), jnp.float32)],
        ),
        out_shape=(jax.ShapeDtypeStruct((B, LANE), jnp.float32),),
        compiler_params=pltpu.CompilerParams(**cp2),
        cost_estimate=cost2,
    )(means, wp, bp, ws_p, bs_p)[0]

    # Single contiguous slice of the fused slab, split into aspect/opinion.
    ao2c = ao_pad[..., :2 * C].astype(jnp.float32)
    return {
        "aspect_logits": ao2c[..., :C],
        "opinion_logits": ao2c[..., C:2 * C],
        "sentiment_logits": sent_pad[:, :C],
    }


# -------------------------- deterministic params --------------------------
def xavier_normal(key, fan_in, fan_out):
    std = (2.0 / (fan_in + fan_out)) ** 0.5
    return std * jax.random.normal(key, (fan_in, fan_out), dtype=jnp.float32)


def init_params(key, hidden_size, num_classes=3, vocab_size=64):
    ks = jax.random.split(key, 5)
    return {
        # embedding table (glue; stands in for the LLM encoder output)
        "emb": 0.02 * jax.random.normal(ks[0], (vocab_size, hidden_size),
                                        dtype=jnp.float32),
        # head weights, xavier_normal like _initialize_weights, zero biases
        "wa": xavier_normal(ks[1], hidden_size, num_classes),
        "ba": jnp.zeros((1, num_classes), jnp.float32),
        "wo": xavier_normal(ks[2], hidden_size, num_classes),
        "bo": jnp.zeros((1, num_classes), jnp.float32),
        "wp": xavier_normal(ks[3], hidden_size, hidden_size),
        "bp": jnp.zeros((1, hidden_size), jnp.float32),
        "ws": xavier_normal(ks[4], hidden_size, num_classes),
        "bs": jnp.zeros((1, num_classes), jnp.float32),
    }


# -------------------------- reference (plain JAX) --------------------------
def absa_head_ref(hidden_states, p):
    aspect = hidden_states @ p["wa"] + p["ba"]
    opinion = hidden_states @ p["wo"] + p["bo"]
    pooled = jnp.tanh(hidden_states.mean(axis=1) @ p["wp"] + p["bp"])
    sentiment = pooled @ p["ws"] + p["bs"]
    return {"aspect_logits": aspect, "opinion_logits": opinion,
            "sentiment_logits": sentiment}


if __name__ == "__main__":
    B, S, H, V = 2, 8, 32, 64

    key = jax.random.PRNGKey(0)
    k_ids, k_params = jax.random.split(key)

    input_ids = jax.random.randint(k_ids, (B, S), 0, V)
    attention_mask = jnp.ones((B, S), dtype=jnp.int32)  # unused by the head
    params = init_params(k_params, H, num_classes=3, vocab_size=V)

    # glue: "LLM embedding" -> hidden_states (B, S, H)
    hidden_states = params["emb"][input_ids]

    ref = absa_head_ref(hidden_states, params)
    names = ("aspect_logits", "opinion_logits", "sentiment_logits")

    # default path: bf16 compute, f32 MXU accumulation — looser tolerance
    out = absa_head(hidden_states, params)
    jax.block_until_ready(out)
    for name in names:
        assert out[name].shape == ref[name].shape, name
        assert jnp.allclose(out[name], ref[name], atol=3e-2, rtol=3e-2), name

    # f32 compute path — tight tolerance
    out_f32 = absa_head(hidden_states, params, compute_dtype=jnp.float32)
    jax.block_until_ready(out_f32)
    for name in names:
        assert out_f32[name].shape == ref[name].shape, name
        assert jnp.allclose(out_f32[name], ref[name], atol=1e-5, rtol=1e-5), name

    print("KERNEL_OK")
</pallas_src>

<mosaic_0001>
module attributes {stable_mosaic.version = 11 : i64} {
  func.func @token_head_kernel(%arg0: i32, %arg1: i32, %arg2: memref<1x8x32xbf16, #tpu.memory_space<vmem>>, %arg3: memref<32x128xbf16, #tpu.memory_space<vmem>>, %arg4: memref<1x128xf32, #tpu.memory_space<vmem>>, %arg5: memref<1x8x128xbf16, #tpu.memory_space<vmem>>, %arg6: memref<1x1x32xf32, #tpu.memory_space<vmem>>) attributes {dimension_semantics = [#tpu.dimension_semantics<parallel>, #tpu.dimension_semantics<arbitrary>], iteration_bounds = array<i64: 2, 1>, scalar_prefetch = 0 : i64, scratch_operands = 0 : i64, tpu.core_type = #tpu.core_type<tc>, window_params = [{transform_indices = @transform_0, window_bounds = array<i64: 1, 8, 32>}, {pipeline_mode = #tpu.pipeline_mode<synchronous>, transform_indices = @transform_1, window_bounds = array<i64: 32, 128>}, {pipeline_mode = #tpu.pipeline_mode<synchronous>, transform_indices = @transform_2, window_bounds = array<i64: 1, 128>}, {transform_indices = @transform_3, window_bounds = array<i64: 1, 8, 128>}, {transform_indices = @transform_4, window_bounds = array<i64: 1, 1, 32>}]} {
    %c0_i32 = arith.constant 0 : i32
    %0 = arith.cmpi eq, %arg1, %c0_i32 : i32
    %1 = arith.extui %0 : i1 to i32
    %c0_i32_0 = arith.constant 0 : i32
    %2 = arith.cmpi ne, %1, %c0_i32_0 : i32
    scf.if %2 {
      %cst_19 = arith.constant 0.000000e+00 : f32
      %22 = vector.broadcast %cst_19 : f32 to vector<1x1x32xf32>
      %c0_20 = arith.constant 0 : index
      %c0_21 = arith.constant 0 : index
      %c0_22 = arith.constant 0 : index
      %23 = vector.load %arg6[%c0_20, %c0_21, %c0_22] : memref<1x1x32xf32, #tpu.memory_space<vmem>>, vector<1x1x32xf32>
      tpu.vector_store %arg6[%c0_20, %c0_21, %c0_22], %22 {strides = array<i32>} : memref<1x1x32xf32, #tpu.memory_space<vmem>>, vector<1x1x32xf32>,
    } else {
    }
    %c0 = arith.constant 0 : index
    %c0_1 = arith.constant 0 : index
    %c0_2 = arith.constant 0 : index
    %3 = vector.load %arg2[%c0, %c0_1, %c0_2] : memref<1x8x32xbf16, #tpu.memory_space<vmem>>, vector<1x8x32xbf16>
    %4 = vector.shape_cast %3 : vector<1x8x32xbf16> to vector<8x32xbf16>
    %c0_3 = arith.constant 0 : index
    %c0_4 = arith.constant 0 : index
    %5 = vector.load %arg3[%c0_3, %c0_4] : memref<32x128xbf16, #tpu.memory_space<vmem>>, vector<32x128xbf16>
    %cst = arith.constant dense<0.000000e+00> : vector<8x128xf32>
    %6 = tpu.matmul %4, %5, %cst {dimension_numbers = #tpu.dot_dimension_numbers<[1], [0], [0], [1], [0, 0, 1, 1], [], []>} : vector<8x32xbf16>, vector<32x128xbf16>, vector<8x128xf32> -> vector<8x128xf32>
    %c0_5 = arith.constant 0 : index
    %c0_6 = arith.constant 0 : index
    %7 = vector.load %arg4[%c0_5, %c0_6] : memref<1x128xf32, #tpu.memory_space<vmem>>, vector<1x128xf32>
    %8 = vector.broadcast %7 : vector<1x128xf32> to vector<8x128xf32>
    %9 = arith.addf %6, %8 : vector<8x128xf32>
    %10 = vector.shape_cast %9 : vector<8x128xf32> to vector<1x8x128xf32>
    %11 = arith.truncf %10 : vector<1x8x128xf32> to vector<1x8x128xbf16>
    %c0_7 = arith.constant 0 : index
    %c0_8 = arith.constant 0 : index
    %c0_9 = arith.constant 0 : index
    %12 = vector.load %arg5[%c0_7, %c0_8, %c0_9] : memref<1x8x128xbf16, #tpu.memory_space<vmem>>, vector<1x8x128xbf16>
    tpu.vector_store %arg5[%c0_7, %c0_8, %c0_9], %11 {strides = array<i32>} : memref<1x8x128xbf16, #tpu.memory_space<vmem>>, vector<1x8x128xbf16>,
    %c0_10 = arith.constant 0 : index
    %c0_11 = arith.constant 0 : index
    %c0_12 = arith.constant 0 : index
    %13 = vector.load %arg6[%c0_10, %c0_11, %c0_12] : memref<1x1x32xf32, #tpu.memory_space<vmem>>, vector<1x1x32xf32>
    %14 = arith.extf %3 : vector<1x8x32xbf16> to vector<1x8x32xf32>
    %cst_13 = arith.constant dense<0.000000e+00> : vector<1x32xf32>
    %15 = vector.multi_reduction <add>, %14, %cst_13 [1] : vector<1x8x32xf32> to vector<1x32xf32>
    %16 = vector.shape_cast %15 : vector<1x32xf32> to vector<1x1x32xf32>
    %17 = arith.addf %13, %16 : vector<1x1x32xf32>
    %c0_14 = arith.constant 0 : index
    %c0_15 = arith.constant 0 : index
    %c0_16 = arith.constant 0 : index
    %18 = vector.load %arg6[%c0_14, %c0_15, %c0_16] : memref<1x1x32xf32, #tpu.memory_space<vmem>>, vector<1x1x32xf32>
    tpu.vector_store %arg6[%c0_14, %c0_15, %c0_16], %17 {strides = array<i32>} : memref<1x1x32xf32, #tpu.memory_space<vmem>>, vector<1x1x32xf32>,
    %c0_i32_17 = arith.constant 0 : i32
    %19 = arith.cmpi eq, %arg1, %c0_i32_17 : i32
    %20 = arith.extui %19 : i1 to i32
    %c0_i32_18 = arith.constant 0 : i32
    %21 = arith.cmpi ne, %20, %c0_i32_18 : i32
    scf.if %21 {
      %c0_19 = arith.constant 0 : index
      %c0_20 = arith.constant 0 : index
      %c0_21 = arith.constant 0 : index
      %22 = vector.load %arg6[%c0_19, %c0_20, %c0_21] : memref<1x1x32xf32, #tpu.memory_space<vmem>>, vector<1x1x32xf32>
      %cst_22 = arith.constant 1.250000e-01 : f32
      %23 = vector.broadcast %cst_22 : f32 to vector<1x1x32xf32>
      %24 = arith.mulf %22, %23 : vector<1x1x32xf32>
      %c0_23 = arith.constant 0 : index
      %c0_24 = arith.constant 0 : index
      %c0_25 = arith.constant 0 : index
      %25 = vector.load %arg6[%c0_23, %c0_24, %c0_25] : memref<1x1x32xf32, #tpu.memory_space<vmem>>, vector<1x1x32xf32>
      tpu.vector_store %arg6[%c0_23, %c0_24, %c0_25], %24 {strides = array<i32>} : memref<1x1x32xf32, #tpu.memory_space<vmem>>, vector<1x1x32xf32>,
    } else {
    }
    return
  }
  func.func @transform_0(%arg0: i32, %arg1: i32) -> (i32, i32, i32) {
    %c0_i32 = arith.constant 0 : i32
    %c0_i32_0 = arith.constant 0 : i32
    return %arg0, %arg1, %c0_i32 : i32, i32, i32
  }
  func.func @transform_1(%arg0: i32, %arg1: i32) -> (i32, i32) {
    %c0_i32 = arith.constant 0 : i32
    %c0_i32_0 = arith.constant 0 : i32
    %c0_i32_1 = arith.constant 0 : i32
    return %c0_i32, %c0_i32_0 : i32, i32
  }
  func.func @transform_2(%arg0: i32, %arg1: i32) -> (i32, i32) {
    %c0_i32 = arith.constant 0 : i32
    %c0_i32_0 = arith.constant 0 : i32
    %c0_i32_1 = arith.constant 0 : i32
    return %c0_i32, %c0_i32_0 : i32, i32
  }
  func.func @transform_3(%arg0: i32, %arg1: i32) -> (i32, i32, i32) {
    %c0_i32 = arith.constant 0 : i32
    %c0_i32_0 = arith.constant 0 : i32
    return %arg0, %arg1, %c0_i32 : i32, i32, i32
  }
  func.func @transform_4(%arg0: i32, %arg1: i32) -> (i32, i32, i32) {
    %c0_i32 = arith.constant 0 : i32
    %c0_i32_0 = arith.constant 0 : i32
    %c0_i32_1 = arith.constant 0 : i32
    return %arg0, %c0_i32, %c0_i32_0 : i32, i32, i32
  }
}

</mosaic_0001>

<llo_original>
// kernel: tpu_custom_call.1
$region0: #{tpu_custom_call.1}
  #allocation0 [shape = 'u32[]', space=smem, size = 0x4, offset = 0x4, fixed_abs, tag = 'smem constant byte address 0x4 - core index']
  #allocation1 [shape = 'u32[144,128]{1,0:T(1,128)}', space=vmem, size = 0x12000, scoped, tag = 'internal scratch']
  %s0 = inlined_call_operand.hbm [shape: bf16[2,8,32], index: 0, kind: input, shape index: {}]
  %s1 = inlined_call_operand.hbm [shape: bf16[32,128], index: 1, kind: input, shape index: {}]
  %s2 = inlined_call_operand.vmem [shape: f32[1,128], index: 2, kind: input, shape index: {}]
  %s3 = inlined_call_operand.hbm [shape: bf16[2,8,128], index: 3, kind: output, shape index: {0}]
  %s4 = inlined_call_operand.hbm [shape: f32[2,1,32], index: 4, kind: output, shape index: {1}]
  %5 = xla_tuple %s3, %s4
  %s6 = sld [smem:[#allocation0]]
  $region69: #{tpu_custom_call.1} parent=0
    _
  %s8 = ssub.s32 1, %s6
  %s9 = scalar_select 0, %s8, %s6
  $region1: #{tpu_custom_call.1} parent=0
    #allocation2 [shape = 'u8[4096]{0}', space=vmem, size = 0x1000, scoped, tag = 'input window, operand 0']
    #allocation3 [shape = 's32[2]{0}', space=sflag, size = 0x8, scoped, tag = 'scoped memory for tpu_custom_call.1']
    #allocation4 [shape = 's32[2]{0}', space=sflag, size = 0x8, scoped, tag = 'scoped memory for tpu_custom_call.1']
    #allocation5 [shape = 'u8[8192]{0}', space=vmem, size = 0x2000, scoped, tag = 'input window, operand 1, single buffered']
    #allocation6 [shape = 's32[1]{0}', space=sflag, size = 0x4, scoped, tag = 'scoped memory for tpu_custom_call.1']
    #allocation7 [shape = 'u8[4096]{0}', space=vmem, size = 0x1000, scoped, tag = 'output window, operand 0']
    #allocation8 [shape = 'u8[1024]{0}', space=vmem, size = 0x400, scoped, tag = 'output window, operand 1']
    #allocation9 [shape = 's32[2]{0}', space=sflag, size = 0x8, scoped, tag = 'scoped memory for tpu_custom_call.1']
    %10 = vsyncpa [#allocation3], 0
    %s11 = scalar_lea.sflag [#allocation3], 1
    %12 = vsyncpa %s11, 0
    %13 = vsyncpa [#allocation6], 0
    %14 = vsyncpa [#allocation4], 0
    %s15 = scalar_lea.sflag [#allocation4], 1
    %16 = vsyncpa %s15, 0
    %17 = vsyncpa [#allocation9], 0
    %s18 = scalar_lea.sflag [#allocation9], 1
    %19 = vsyncpa %s18, 0
    loop: start=0, step=1, limit=4
    $region2: #{tpu_custom_call.1} parent=1 // loop_pre_header
      _
    $region3: #{tpu_custom_call.1} parent=1 // loop_header
      %s21 = sphi 0, %s25
      %p22 = scmp.ge.s32.totalorder %s21, 4
      %s28 = sphi 0, %s40
      %s29 = sphi 0, %s36
      %s30 = sphi 0, %s28
      %s31 = sphi 0, %s29
      %s32 = sphi 0, %s30
      %s33 = sphi 0, %s31
      %s45 = sphi 0, %s47
      %s48 = sphi 0, %s45
      %s49 = sphi 0, %s48
      %s65 = sphi 0, %s49
      %s69 = sphi 0, %s69
      %s71 = sphi 0, %s69
      %s72 = sphi 0, %s71
      %s86 = sphi 0, %s72
      %s90 = sphi 0, %s90
      %s92 = sphi 0, %s90
      %s93 = sphi 0, %s92
      %s107 = sphi 0, %s93
      %s115 = sphi 0, %s117
      %s118 = sphi 0, %s115
      %s119 = sphi 0, %s118
      %s135 = sphi 0, %s119
      %s141 = sphi 0, %s143
      %s144 = sphi 0, %s141
      %s145 = sphi 0, %s144
      %s161 = sphi 0, %s145
    $region4: #{tpu_custom_call.1} parent=1 // loop_header_branch
      %24 = sbr.rel (%p22) target = $region8
    $region5: #{tpu_custom_call.1} parent=1 // loop_body
      %s26 = ssub.s32 %s21, 1
      %s27 = ssub.s32 %s21, 2
      %s34 = sadd.s32 1, %s29
      %p35 = scmp.ge.s32.totalorder %s34, 1
      %s36 = scalar_select %p35, 0, %s34
      %s37 = sadd.s32 1, %s28
      %s38 = scalar_select %p35, %s37, %s28
      %p39 = scmp.ge.s32.totalorder %s38, 2
      %s40 = scalar_select %p39, 0, %s38
      %s41 = ssub.s32 %s28, %s40
      %s42 = ssub.s32 %s29, %s36
      %s43 = sor.u32 %s41, %s42
      %p44 = scmp.eq.s32.totalorder %s43, 0
      %s46 = sadd.s32 %s45, 1
      %s47 = scalar_select %p44, %s45, %s46
      %p50 = pneg %p44
      %p51 = scmp.eq.s32.totalorder %s21, 1
      %p52 = por %p50, %p51
      %p53 = scmp.ne.s32.totalorder %s45, %s48
      %p54 = scmp.eq.s32.totalorder %s21, 0
      %p55 = por %p53, %p54
      %p56 = scmp.ne.s32.totalorder %s45, %s48
      %p57 = scmp.eq.s32.totalorder %s26, 1
      %p58 = por %p56, %p57
      %p59 = scmp.ne.s32.totalorder %s48, %s49
      %p60 = scmp.eq.s32.totalorder %s26, 0
      %p61 = por %p59, %p60
      %p62 = scmp.ne.s32.totalorder %s48, %s49
      %p63 = scmp.eq.s32.totalorder %s27, 1
      %p64 = por %p62, %p63
      %p66 = scmp.ne.s32.totalorder %s49, %s65
      %p67 = scmp.eq.s32.totalorder %s27, 0
      %p68 = por %p66, %p67
      %s70 = sadd.s32 %s69, 1
      %p73 = scmp.eq.s32.totalorder %s21, 1
      %p74 = scmp.ne.s32.totalorder %s69, %s71
      %p75 = scmp.eq.s32.totalorder %s21, 0
      %p76 = por %p74, %p75
      %p77 = scmp.ne.s32.totalorder %s69, %s71
      %p78 = scmp.eq.s32.totalorder %s26, 1
      %p79 = por %p77, %p78
      %p80 = scmp.ne.s32.totalorder %s71, %s72
      %p81 = scmp.eq.s32.totalorder %s26, 0
      %p82 = por %p80, %p81
      %p83 = scmp.ne.s32.totalorder %s71, %s72
      %p84 = scmp.eq.s32.totalorder %s27, 1
      %p85 = por %p83, %p84
      %p87 = scmp.ne.s32.totalorder %s72, %s86
      %p88 = scmp.eq.s32.totalorder %s27, 0
      %p89 = por %p87, %p88
      %s91 = sadd.s32 %s90, 1
      %p94 = scmp.eq.s32.totalorder %s21, 1
      %p95 = scmp.ne.s32.totalorder %s90, %s92
      %p96 = scmp.eq.s32.totalorder %s21, 0
      %p97 = por %p95, %p96
      %p98 = scmp.ne.s32.totalorder %s90, %s92
      %p99 = scmp.eq.s32.totalorder %s26, 1
      %p100 = por %p98, %p99
      %p101 = scmp.ne.s32.totalorder %s92, %s93
      %p102 = scmp.eq.s32.totalorder %s26, 0
      %p103 = por %p101, %p102
      %p104 = scmp.ne.s32.totalorder %s92, %s93
      %p105 = scmp.eq.s32.totalorder %s27, 1
      %p106 = por %p104, %p105
      %p108 = scmp.ne.s32.totalorder %s93, %s107
      %p109 = scmp.eq.s32.totalorder %s27, 0
      %p110 = por %p108, %p109
      %s111 = ssub.s32 %s28, %s40
      %s112 = ssub.s32 %s29, %s36
      %s113 = sor.u32 %s111, %s112
      %p114 = scmp.eq.s32.totalorder %s113, 0
      %s116 = sadd.s32 %s115, 1
      %s117 = scalar_select %p114, %s115, %s116
      %p120 = pneg %p114
      %p121 = scmp.eq.s32.totalorder %s21, 1
      %p122 = por %p120, %p121
      %p123 = scmp.ne.s32.totalorder %s115, %s118
      %p124 = scmp.eq.s32.totalorder %s21, 0
      %p125 = por %p123, %p124
      %p126 = scmp.ne.s32.totalorder %s115, %s118
      %p127 = scmp.eq.s32.totalorder %s26, 1
      %p128 = por %p126, %p127
      %p129 = scmp.ne.s32.totalorder %s118, %s119
      %p130 = scmp.eq.s32.totalorder %s26, 0
      %p131 = por %p129, %p130
      %p132 = scmp.ne.s32.totalorder %s118, %s119
      %p133 = scmp.eq.s32.totalorder %s27, 1
      %p134 = por %p132, %p133
      %p136 = scmp.ne.s32.totalorder %s119, %s135
      %p137 = scmp.eq.s32.totalorder %s27, 0
      %p138 = por %p136, %p137
      %s139 = ssub.s32 %s28, %s40
      %p140 = scmp.eq.s32.totalorder %s139, 0
      %s142 = sadd.s32 %s141, 1
      %s143 = scalar_select %p140, %s141, %s142
      %p146 = pneg %p140
      %p147 = scmp.eq.s32.totalorder %s21, 1
      %p148 = por %p146, %p147
      %p149 = scmp.ne.s32.totalorder %s141, %s144
      %p150 = scmp.eq.s32.totalorder %s21, 0
      %p151 = por %p149, %p150
      %p152 = scmp.ne.s32.totalorder %s141, %s144
      %p153 = scmp.eq.s32.totalorder %s26, 1
      %p154 = por %p152, %p153
      %p155 = scmp.ne.s32.totalorder %s144, %s145
      %p156 = scmp.eq.s32.totalorder %s26, 0
      %p157 = por %p155, %p156
      %p158 = scmp.ne.s32.totalorder %s144, %s145
      %p159 = scmp.eq.s32.totalorder %s27, 1
      %p160 = por %p158, %p159
      %p162 = scmp.ne.s32.totalorder %s145, %s161
      %p163 = scmp.eq.s32.totalorder %s27, 0
      %p164 = por %p162, %p163
      %p165 = scmp.le.s32.totalorder 1, %s21
      %p166 = scmp.lt.s32.totalorder %s21, 3
      %p167 = pnand %p165, %p166
      %p168 = pneg %p167
      // Predicated region
      $region9: #{tpu_custom_call.1} parent=5 // pred_check
        _
      $region10: #{tpu_custom_call.1} parent=5 // pred_check_branch
        %170 = sbr.rel (%p167) target = $region12
      $region11: #{tpu_custom_call.1} parent=5 // pred_region
        %s171 = ssub.s32 %s21, 1
        // Predicated region
        $region13: #{tpu_custom_call.1} parent=11 // pred_check
          %p172 = pneg %p82
        $region14: #{tpu_custom_call.1} parent=11 // pred_check_branch
          %174 = sbr.rel (%p172) target = $region16
        $region15: #{tpu_custom_call.1} parent=11 // pred_region
          %s176 = ssub.s32 256, 256
          %177 = vsyncadd [#allocation6], %s176
          %s178 = sshll.u32 [#allocation5], 4
          %s179 = int_to_ptr.vmem [resolvable:$true] %s178
          %184 = dma.hbm_to_vmem [thread:$0]  %s1, 256, %s179, [#allocation6], 64, 64, 4
        $region16: #{tpu_custom_call.1} parent=11 // pred_fallthru
          _
        // Predicated region
        $region17: #{tpu_custom_call.1} parent=11 // pred_check
          %p185 = pneg %p103
        $region18: #{tpu_custom_call.1} parent=11 // pred_check_branch
          %187 = sbr.rel (%p185) target = $region20
        $region19: #{tpu_custom_call.1} parent=11 // pred_region
          _
        $region20: #{tpu_custom_call.1} parent=11 // pred_fallthru
          _
      $region12: #{tpu_custom_call.1} parent=5 // pred_fallthru
        _
      %p188 = scmp.lt.s32.totalorder %s21, 2
      // Predicated region
      $region21: #{tpu_custom_call.1} parent=5 // pred_check
        %p189 = pneg %p188
      $region22: #{tpu_custom_call.1} parent=5 // pred_check_branch
        %191 = sbr.rel (%p189) target = $region24
      $region23: #{tpu_custom_call.1} parent=5 // pred_region
        // Predicated region
        $region25: #{tpu_custom_call.1} parent=23 // pred_check
          %p192 = pneg %p55
        $region26: #{tpu_custom_call.1} parent=23 // pred_check_branch
          %194 = sbr.rel (%p192) target = $region28
        $region27: #{tpu_custom_call.1} parent=23 // pred_region
          %s195 = sand.u32 %s45, 1
          %s196 = scalar_lea.sflag [#allocation3], %s195
          %s197 = sand.u32 %s45, 1
          %s198 = smul.addr %s197, 4
          %s199 = scalar_lea.vmem [#allocation2], %s198
          %s201 = ssub.s32 64, 64
          %202 = vsyncadd %s196, %s201
          %s203 = sadd.s32 %s29, %s28
          %s204 = smul.addr %s203, 64
          %s205 = scalar_lea.hbm %s0, %s204
          %s207 = sshll.u32 %s199, 4
          %s208 = int_to_ptr.vmem [resolvable:$true] %s207
          %210 = dma.hbm_to_vmem [thread:$0]  %s205, 64, %s208, %s196
        $region28: #{tpu_custom_call.1} parent=23 // pred_fallthru
          _
      $region24: #{tpu_custom_call.1} parent=5 // pred_fallthru
        _
      %p211 = scmp.le.s32.totalorder 1, %s21
      %p212 = scmp.lt.s32.totalorder %s21, 3
      %p213 = pnand %p211, %p212
      %p214 = pneg %p213
      // Predicated region
      $region29: #{tpu_custom_call.1} parent=5 // pred_check
        _
      $region30: #{tpu_custom_call.1} parent=5 // pred_check_branch
        %216 = sbr.rel (%p213) target = $region32
      $region31: #{tpu_custom_call.1} parent=5 // pred_region
        %s217 = ssub.s32 %s21, 1
        %s218 = sand.u32 %s48, 1
        %s219 = scalar_lea.sflag [#allocation3], %s218
        %s220 = sand.u32 %s48, 1
        %s221 = smul.addr %s220, 4
        %s222 = scalar_lea.vmem [#allocation2], %s221
        // Predicated region
        $region33: #{tpu_custom_call.1} parent=31 // pred_check
          %p223 = pneg %p61
        $region34: #{tpu_custom_call.1} parent=31 // pred_check_branch
          %225 = sbr.rel (%p223) target = $region36
        $region35: #{tpu_custom_call.1} parent=31 // pred_region
          %226 = dma.done %s219, 64
        $region36: #{tpu_custom_call.1} parent=31 // pred_fallthru
          _
        // Predicated region
        $region37: #{tpu_custom_call.1} parent=31 // pred_check
          %p227 = pneg %p82
        $region38: #{tpu_custom_call.1} parent=31 // pred_check_branch
          %229 = sbr.rel (%p227) target = $region40
        $region39: #{tpu_custom_call.1} parent=31 // pred_region
          %230 = dma.done [#allocation6], 256
        $region40: #{tpu_custom_call.1} parent=31 // pred_fallthru
          _
        %s231 = sand.u32 %s48, 1
        %s232 = scalar_lea.sflag [#allocation3], %s231
        %s233 = sand.u32 %s48, 1
        %s234 = smul.addr %s233, 4
        %s235 = scalar_lea.vmem [#allocation2], %s234
        %p236 = pneg %p61
        %p237 = pneg %p58
        %p238 = pneg %p82
        %p239 = pneg %p79
        %p240 = pneg %p103
        %p241 = pneg %p100
        %p242 = pneg %p131
        %p243 = pneg %p128
        %s244 = sand.u32 %s118, 1
        %s245 = scalar_lea.sflag [#allocation4], %s244
        %s246 = sand.u32 %s118, 1
        %s247 = smul.addr %s246, 4
        %s248 = scalar_lea.vmem [#allocation7], %s247
        %p249 = pneg %p157
        %p250 = pneg %p154
        %s251 = sand.u32 %s144, 1
        %s252 = scalar_lea.sflag [#allocation9], %s251
        %s253 = sand.u32 %s144, 1
        %s254 = scalar_lea.vmem [#allocation8], %s253
        %p256 = scmp.eq.s32.totalorder %s31, 0
        // Predicated region
        $region41: #{tpu_custom_call.1} parent=31 // pred_check
          %p257 = pneg %p256
        $region42: #{tpu_custom_call.1} parent=31 // pred_check_branch
          %259 = sbr.rel (%p257) target = $region44
        $region43: #{tpu_custom_call.1} parent=31 // pred_region
          %vm260 = vcmask 253952
          %261 = vst.msk [vmem:[%s254] sm:$0x1] %vm260, 0.0
        $region44: #{tpu_custom_call.1} parent=31 // pred_fallthru
          _
        %v262 = vld [vmem:[%s222] sm:$0xf]
        %v263 = vld [vmem:[#allocation5] sm:$0xf]
        %v264 = vld [vmem:[#allocation5 + $0x4] sm:$0xf]
        %v265 = vld [vmem:[#allocation5 + $0x8] sm:$0xf]
        %v266 = vld [vmem:[#allocation5 + $0xc] sm:$0xf]
        %v267 = vld [vmem:[%s2] sm:$0x1]
        %v269 = vlaneseq
        %v270 = vshrl.u32 %v269, 7
        %v271 = vsub.s32 0, %v270
        %v272 = vrot.slane %v267, %v271
        %v278 = vunpack.c.l.b16 %v263
        %v279 = vunpack.c.l.b16 %v264
        %v280 = vunpack.c.l.b16 %v265
        %v281 = vunpack.c.l.b16 %v266
        %v282 = vpack.c.b16 %v279, %v278
        %v283 = vpack.c.b16 %v281, %v280
        %vm286 = vcmask 261120
        %v288 = vsel %vm286, %v262, 0
        %290 = vmatprep.subr.bf16.mxu0 0
        %291 = vmatpush1.bf16.msra.mxu0 0
        %292 = vmatprep.subr.bf16.mxu0 0
        %293 = vmatpush1.bf16.msra.mxu0 0
        %294 = vmatprep.subr.bf16.mxu0 0
        %295 = vmatpush1.bf16.msra.mxu0 0
        %296 = vmatprep.subr.bf16.mxu0 0
        %297 = vmatpush1.bf16.msra.mxu0 0
        %298 = vmatprep.subr.bf16.mxu0 0
        %299 = vmatpush1.bf16.msra.mxu0 0
        %300 = vmatprep.subr.bf16.mxu0 0
        %301 = vmatpush1.bf16.msra.mxu0 0
        %302 = vmatprep.subr.bf16.mxu0 0
        %303 = vmatpush1.bf16.msra.mxu0 %v283
        %304 = vmatprep.subr.bf16.mxu0 0
        %305 = vmatpush1.bf16.msra.mxu0 %v282
        %306 = vmatprep.subr.bf16.mxu0 0
        %307 = vmatpush2.bf16.msra.mxu0 0
        %308 = vmatprep.subr.bf16.mxu0 0
        %309 = vmatpush2.bf16.msra.mxu0 0
        %310 = vmatprep.subr.bf16.mxu0 0
        %311 = vmatpush2.bf16.msra.mxu0 0
        %312 = vmatprep.subr.bf16.mxu0 0
        %313 = vmatpush2.bf16.msra.mxu0 0
        %314 = vmatprep.subr.bf16.mxu0 0
        %315 = vmatpush2.bf16.msra.mxu0 0
        %316 = vmatprep.subr.bf16.mxu0 0
        %317 = vmatpush2.bf16.msra.mxu0 0
        %318 = vmatprep.subr.bf16.mxu0 0
        %319 = vmatpush2.bf16.msra.mxu0 0
        %320 = vmatprep.subr.bf16.mxu0 0
        %321 = vmatpush2.bf16.msra.mxu0 0
        %322 = vmatprep.mubr.bf16.mxu0 0
        %323 = vmatmul.mubr.bf16.gmra.mxu0 %v288
        %v324 = vpop.f32.mrf.mxu0
        %v325 = vadd.f32 %v272, %v324
        %v326 = vpop.f32.mrf.mxu0
        %v327 = vpop.f32.mrf.mxu0
        %v328 = vpop.f32.mrf.mxu0
        %329 = vdwg.mxu0
        %v330 = vpack.c.bf16 %v325, %v325
        %331 = vst [vmem:[%s248] sm:$0xf] %v330
        %v332 = vld [vmem:[%s254] sm:$0x1]
        %v333 = vunpack.c.l.bf16 %v262
        %v334 = vsel %vm286, %v333, 0.0
        %v335 = vrot.slane %v334, 4
        %v336 = vadd.f32 %v334, %v335
        %v337 = vrot.slane %v336, 2
        %v338 = vadd.f32 %v336, %v337
        %v339 = vrot.slane %v338, 1
        %v340 = vadd.f32 %v338, %v339
        %v341 = vadd.f32 %v332, %v340
        %vm342 = vcmask 253952
        %343 = vst.msk [vmem:[%s254] sm:$0x1] %vm342, %v341
        // Predicated region
        $region45: #{tpu_custom_call.1} parent=31 // pred_check
          %p344 = pneg %p256
        $region46: #{tpu_custom_call.1} parent=31 // pred_check_branch
          %346 = sbr.rel (%p344) target = $region48
        $region47: #{tpu_custom_call.1} parent=31 // pred_region
          %v347 = vld [vmem:[%s254] sm:$0x1]
          %v348 = vmul.f32 %v347, 0.125
          %349 = vst.msk [vmem:[%s254] sm:$0x1] %vm342, %v348
        $region48: #{tpu_custom_call.1} parent=31 // pred_fallthru
          _
        %s350 = sand.u32 %s118, 1
        %s351 = scalar_lea.sflag [#allocation4], %s350
        %s352 = sand.u32 %s118, 1
        %s353 = smul.addr %s352, 4
        %s354 = scalar_lea.vmem [#allocation7], %s353
        %s355 = sand.u32 %s144, 1
        %s356 = scalar_lea.sflag [#allocation9], %s355
        %s357 = sand.u32 %s144, 1
        %s358 = scalar_lea.vmem [#allocation8], %s357
        // Predicated region
        $region49: #{tpu_custom_call.1} parent=31 // pred_check
          %p359 = pneg %p128
        $region50: #{tpu_custom_call.1} parent=31 // pred_check_branch
          %361 = sbr.rel (%p359) target = $region52
        $region51: #{tpu_custom_call.1} parent=31 // pred_region
          %s363 = ssub.s32 64, 64
          %364 = vsyncadd %s351, %s363
          %s365 = sadd.s32 %s31, %s30
          %s366 = smul.addr %s365, 64
          %s367 = scalar_lea.hbm %s3, %s366
          %s369 = sshll.u32 %s354, 4
          %s370 = int_to_ptr.vmem [resolvable:$true] %s369
          %372 = dma.vmem_to_hbm [thread:$0]  %s370, 64, %s367, %s351
        $region52: #{tpu_custom_call.1} parent=31 // pred_fallthru
          _
        // Predicated region
        $region53: #{tpu_custom_call.1} parent=31 // pred_check
          %p373 = pneg %p154
        $region54: #{tpu_custom_call.1} parent=31 // pred_check_branch
          %375 = sbr.rel (%p373) target = $region56
        $region55: #{tpu_custom_call.1} parent=31 // pred_region
          %s377 = ssub.s32 16, 16
          %378 = vsyncadd %s356, %s377
          %s379 = smul.addr %s30, 16
          %s380 = scalar_lea.hbm %s4, %s379
          %s382 = sshll.u32 %s358, 4
          %s383 = int_to_ptr.vmem [resolvable:$true] %s382
          %385 = dma.vmem_to_hbm [thread:$0]  %s383, 16, %s380, %s356
        $region56: #{tpu_custom_call.1} parent=31 // pred_fallthru
          _
      $region32: #{tpu_custom_call.1} parent=5 // pred_fallthru
        _
      %p386 = scmp.le.s32.totalorder 2, %s21
      // Predicated region
      $region57: #{tpu_custom_call.1} parent=5 // pred_check
        %p387 = pneg %p386
      $region58: #{tpu_custom_call.1} parent=5 // pred_check_branch
        %389 = sbr.rel (%p387) target = $region60
      $region59: #{tpu_custom_call.1} parent=5 // pred_region
        %s390 = ssub.s32 %s21, 2
        // Predicated region
        $region61: #{tpu_custom_call.1} parent=59 // pred_check
          %p391 = pneg %p134
        $region62: #{tpu_custom_call.1} parent=59 // pred_check_branch
          %393 = sbr.rel (%p391) target = $region64
        $region63: #{tpu_custom_call.1} parent=59 // pred_region
          %s394 = sand.u32 %s119, 1
          %s395 = scalar_lea.sflag [#allocation4], %s394
          %s396 = sand.u32 %s119, 1
          %s397 = smul.addr %s396, 4
          %s398 = scalar_lea.vmem [#allocation7], %s397
          %399 = dma.done %s395, 64
        $region64: #{tpu_custom_call.1} parent=59 // pred_fallthru
          _
        // Predicated region
        $region65: #{tpu_custom_call.1} parent=59 // pred_check
          %p400 = pneg %p160
        $region66: #{tpu_custom_call.1} parent=59 // pred_check_branch
          %402 = sbr.rel (%p400) target = $region68
        $region67: #{tpu_custom_call.1} parent=59 // pred_region
          %s403 = sand.u32 %s145, 1
          %s404 = scalar_lea.sflag [#allocation9], %s403
          %s405 = sand.u32 %s145, 1
          %s406 = scalar_lea.vmem [#allocation8], %s405
          %407 = dma.done %s404, 16
        $region68: #{tpu_custom_call.1} parent=59 // pred_fallthru
          _
      $region60: #{tpu_custom_call.1} parent=5 // pred_fallthru
        _
    $region6: #{tpu_custom_call.1} parent=1 // loop_footer
      %s25 = sadd.s32 1, %s21
    $region7: #{tpu_custom_call.1} parent=1 // loop_footer_branch
      %20 = sbr.rel target = $region3
    $region8: #{tpu_custom_call.1} parent=1 // loop_exit
      _
    %408 = vsyncpa [#allocation3], 1
    %s409 = scalar_lea.sflag [#allocation3], 1
    %410 = vsyncpa %s409, 1
    %411 = vsyncpa [#allocation6], 1
    %412 = vsyncpa [#allocation4], 1
    %s413 = scalar_lea.sflag [#allocation4], 1
    %414 = vsyncpa %s413, 1
    %415 = vsyncpa [#allocation9], 1
    %s416 = scalar_lea.sflag [#allocation9], 1
    %417 = vsyncpa %s416, 1

</llo_original>
